<compile_context>
chip_gen: v5e
topology: v5e:2x2
jax: 0.10.0
libtpu: 0.0.40
codegen_flags: <defaults>
</compile_context>

<pallas_src>
import numpy as np
import jax
import jax.numpy as jnp
from jax import lax
from jax.experimental import pallas as pl
from jax.experimental.pallas import tpu as pltpu


def _dft_kernel(x_ref, w_ref, out_ref):
    # x_ref:   (B, N)   full input block, resident across the whole grid
    # w_ref:   (tn, N)  tn rows of the fused [W_re; W_im] weight (nn.Linear layout)
    # out_ref: (B, tn)  the matching slice of the fused (B, 2N) output
    # Contract the last dim of both operands on the MXU -- equivalent to
    # x @ w_tile.T but with no materialized transpose.
    out_ref[...] = lax.dot_general(
        x_ref[...],
        w_ref[...],
        dimension_numbers=(((1,), (1,)), ((), ())),
        preferred_element_type=jnp.float32,
    )


def fuse_dft_weights(w_re, w_im):
    """One-time fusion of the two nn.Linear weights into a single (2N, N) matrix."""
    return jnp.concatenate([w_re, w_im], axis=0)


def _pick_tn(N, tn):
    total_cols = 2 * N
    if tn is None:
        # Default: one N-column tile per step -> grid of 2 "parallel" steps
        # (keeps both TensorCores busy on v7x).  Clamp so a double-buffered
        # f32 weight tile (2 * tn * N * 4 bytes) stays comfortably inside
        # even v5e's 16 MiB scoped-VMEM default.
        tn = N
        budget_bytes = 12 * 1024 * 1024
        while tn > 128 and 2 * tn * N * 4 > budget_bytes:
            tn //= 2
    assert total_cols % tn == 0, "2*N must be divisible by tn"
    assert tn % 128 == 0, "tn must be lane-aligned (multiple of 128)"
    return tn


def learnable_dft(x, w_cat, *, tn=None):
    """x: (B, N) f32; w_cat: (2N, N) fused [W_re; W_im] in nn.Linear layout."""
    B, N = x.shape
    assert w_cat.shape == (2 * N, N)
    tn = _pick_tn(N, tn)
    grid = (2 * N // tn,)

    cost = pl.CostEstimate(
        flops=4 * B * N * N,                              # two (B,N)x(N,N) matmuls
        transcendentals=0,
        bytes_accessed=(2 * N * N + B * N + 2 * B * N) * 4,
    )

    out = pl.pallas_call(
        _dft_kernel,
        out_shape=jax.ShapeDtypeStruct((B, 2 * N), jnp.float32),
        grid_spec=pltpu.PrefetchScalarGridSpec(
            num_scalar_prefetch=0,
            grid=grid,
            in_specs=[
                pl.BlockSpec((B, N), lambda j: (0, 0)),    # x: full block every step
                pl.BlockSpec((tn, N), lambda j: (j, 0)),   # fused weight rows [j*tn, (j+1)*tn)
            ],
            out_specs=pl.BlockSpec((B, tn), lambda j: (0, j)),
        ),
        compiler_params=pltpu.CompilerParams(
            dimension_semantics=("parallel",),
        ),
        cost_estimate=cost,
    )(x, w_cat)

    return out[:, :N], out[:, N:]


def make_dft_weights(N):
    # Same deterministic init as the PyTorch module's __init__.
    t = np.arange(N)
    k = t.reshape((N, 1))
    F_re = np.cos(2 * np.pi * k * t / N).astype(np.float32)
    F_im = (-np.sin(2 * np.pi * k * t / N)).astype(np.float32)
    return jnp.asarray(F_re), jnp.asarray(F_im)


if __name__ == "__main__":
    N = 512   # module's N
    B = 8

    w_re, w_im = make_dft_weights(N)
    w_cat = fuse_dft_weights(w_re, w_im)          # one-time weight fusion
    x = jax.random.normal(jax.random.PRNGKey(0), (B, N), dtype=jnp.float32)

    X_re, X_im = learnable_dft(x, w_cat)
    jax.block_until_ready((X_re, X_im))

    # Sanity check against plain-JAX reference of nn.Linear semantics.
    ref_re = x @ w_re.T
    ref_im = x @ w_im.T
    assert jnp.allclose(X_re, ref_re, atol=1e-3, rtol=1e-3)
    assert jnp.allclose(X_im, ref_im, atol=1e-3, rtol=1e-3)

    print("KERNEL_OK")
</pallas_src>

<mosaic_0001>
module attributes {stable_mosaic.version = 11 : i64} {
  func.func @_dft_kernel(%arg0: i32, %arg1: memref<8x512xf32, #tpu.memory_space<vmem>>, %arg2: memref<512x512xf32, #tpu.memory_space<vmem>>, %arg3: memref<8x512xf32, #tpu.memory_space<vmem>>) attributes {dimension_semantics = [#tpu.dimension_semantics<parallel>], iteration_bounds = array<i64: 2>, scalar_prefetch = 0 : i64, scratch_operands = 0 : i64, tpu.core_type = #tpu.core_type<tc>, window_params = [{pipeline_mode = #tpu.pipeline_mode<synchronous>, transform_indices = @transform_0, window_bounds = array<i64: 8, 512>}, {transform_indices = @transform_1, window_bounds = array<i64: 512, 512>}, {transform_indices = @transform_2, window_bounds = array<i64: 8, 512>}]} {
    %c0 = arith.constant 0 : index
    %c0_0 = arith.constant 0 : index
    %0 = vector.load %arg1[%c0, %c0_0] : memref<8x512xf32, #tpu.memory_space<vmem>>, vector<8x512xf32>
    %c0_1 = arith.constant 0 : index
    %c0_2 = arith.constant 0 : index
    %1 = vector.load %arg2[%c0_1, %c0_2] : memref<512x512xf32, #tpu.memory_space<vmem>>, vector<512x512xf32>
    %cst = arith.constant dense<0.000000e+00> : vector<8x512xf32>
    %2 = tpu.matmul %0, %1, %cst {dimension_numbers = #tpu.dot_dimension_numbers<[1], [1], [0], [0], [0, 0, 1, 0], [], []>} : vector<8x512xf32>, vector<512x512xf32>, vector<8x512xf32> -> vector<8x512xf32>
    %c0_3 = arith.constant 0 : index
    %c0_4 = arith.constant 0 : index
    %3 = vector.load %arg3[%c0_3, %c0_4] : memref<8x512xf32, #tpu.memory_space<vmem>>, vector<8x512xf32>
    tpu.vector_store %arg3[%c0_3, %c0_4], %2 {strides = array<i32>} : memref<8x512xf32, #tpu.memory_space<vmem>>, vector<8x512xf32>,
    return
  }
  func.func @transform_0(%arg0: i32) -> (i32, i32) {
    %c0_i32 = arith.constant 0 : i32
    %c0_i32_0 = arith.constant 0 : i32
    %c0_i32_1 = arith.constant 0 : i32
    return %c0_i32, %c0_i32_0 : i32, i32
  }
  func.func @transform_1(%arg0: i32) -> (i32, i32) {
    %c0_i32 = arith.constant 0 : i32
    %c0_i32_0 = arith.constant 0 : i32
    return %arg0, %c0_i32 : i32, i32
  }
  func.func @transform_2(%arg0: i32) -> (i32, i32) {
    %c0_i32 = arith.constant 0 : i32
    %c0_i32_0 = arith.constant 0 : i32
    return %c0_i32, %arg0 : i32, i32
  }
}

</mosaic_0001>

<llo_original>
// kernel: tpu_custom_call.1
$region0: #{tpu_custom_call.1}
  #allocation0 [shape = 'u32[]', space=smem, size = 0x4, offset = 0x4, fixed_abs, tag = 'smem constant byte address 0x4 - core index']
  #allocation1 [shape = 'u32[72,128]{1,0:T(1,128)}', space=vmem, size = 0x9000, scoped, tag = 'internal scratch']
  %s0 = inlined_call_operand.hbm [shape: f32[8,512], index: 0, kind: input, shape index: {}]
  %s1 = inlined_call_operand.hbm [shape: f32[1024,512], index: 1, kind: input, shape index: {}]
  %s2 = inlined_call_operand.hbm [shape: f32[8,1024], index: 2, kind: output, shape index: {}]
  %s3 = sld [smem:[#allocation0]]
  $region49: #{tpu_custom_call.1} parent=0
    _
  %s5 = ssub.s32 1, %s3
  %s6 = scalar_select 0, %s5, %s3
  $region1: #{tpu_custom_call.1} parent=0
    #allocation2 [shape = 'u8[16384]{0}', space=vmem, size = 0x4000, scoped, tag = 'input window, operand 0, single buffered']
    #allocation3 [shape = 's32[2]{0}', space=sflag, size = 0x8, scoped, tag = 'scoped memory for tpu_custom_call.1']
    #allocation4 [shape = 's32[2]{0}', space=sflag, size = 0x8, scoped, tag = 'scoped memory for tpu_custom_call.1']
    #allocation5 [shape = 'u8[2097152]{0}', space=vmem, size = 0x200000, scoped, tag = 'input window, operand 1']
    #allocation6 [shape = 's32[2]{0}', space=sflag, size = 0x8, scoped, tag = 'scoped memory for tpu_custom_call.1']
    #allocation7 [shape = 'u8[32768]{0}', space=vmem, size = 0x8000, scoped, tag = 'output window, operand 0']
    %7 = vsyncpa [#allocation3], 0
    %8 = vsyncpa [#allocation6], 0
    %s9 = scalar_lea.sflag [#allocation6], 1
    %10 = vsyncpa %s9, 0
    %11 = vsyncpa [#allocation4], 0
    %s12 = scalar_lea.sflag [#allocation4], 1
    %13 = vsyncpa %s12, 0
    loop: start=0, step=1, limit=4
    $region2: #{tpu_custom_call.1} parent=1 // loop_pre_header
      _
    $region3: #{tpu_custom_call.1} parent=1 // loop_header
      %s15 = sphi 0, %s19
      %p16 = scmp.ge.s32.totalorder %s15, 4
      %s23 = sphi 0, %s23
      %s25 = sphi 0, %s23
      %s26 = sphi 0, %s25
      %s40 = sphi 0, %s26
      %s46 = sphi 0, %s48
      %s49 = sphi 0, %s46
      %s50 = sphi 0, %s49
      %s66 = sphi 0, %s50
      %s72 = sphi 0, %s74
      %s75 = sphi 0, %s72
      %s76 = sphi 0, %s75
      %s92 = sphi 0, %s76
    $region4: #{tpu_custom_call.1} parent=1 // loop_header_branch
      %18 = sbr.rel (%p16) target = $region8
    $region5: #{tpu_custom_call.1} parent=1 // loop_body
      %s20 = ssub.s32 %s15, 1
      %s21 = ssub.s32 %s15, 2
      %s22 = sadd.s32 %s15, 1
      %s24 = sadd.s32 %s23, 1
      %p27 = scmp.eq.s32.totalorder %s15, 1
      %p28 = scmp.ne.s32.totalorder %s23, %s25
      %p29 = scmp.eq.s32.totalorder %s15, 0
      %p30 = por %p28, %p29
      %p31 = scmp.ne.s32.totalorder %s23, %s25
      %p32 = scmp.eq.s32.totalorder %s20, 1
      %p33 = por %p31, %p32
      %p34 = scmp.ne.s32.totalorder %s25, %s26
      %p35 = scmp.eq.s32.totalorder %s20, 0
      %p36 = por %p34, %p35
      %p37 = scmp.ne.s32.totalorder %s25, %s26
      %p38 = scmp.eq.s32.totalorder %s21, 1
      %p39 = por %p37, %p38
      %p41 = scmp.ne.s32.totalorder %s26, %s40
      %p42 = scmp.eq.s32.totalorder %s21, 0
      %p43 = por %p41, %p42
      %s44 = ssub.s32 %s15, %s22
      %p45 = scmp.eq.s32.totalorder %s44, 0
      %s47 = sadd.s32 %s46, 1
      %s48 = scalar_select %p45, %s46, %s47
      %p51 = pneg %p45
      %p52 = scmp.eq.s32.totalorder %s15, 1
      %p53 = por %p51, %p52
      %p54 = scmp.ne.s32.totalorder %s46, %s49
      %p55 = scmp.eq.s32.totalorder %s15, 0
      %p56 = por %p54, %p55
      %p57 = scmp.ne.s32.totalorder %s46, %s49
      %p58 = scmp.eq.s32.totalorder %s20, 1
      %p59 = por %p57, %p58
      %p60 = scmp.ne.s32.totalorder %s49, %s50
      %p61 = scmp.eq.s32.totalorder %s20, 0
      %p62 = por %p60, %p61
      %p63 = scmp.ne.s32.totalorder %s49, %s50
      %p64 = scmp.eq.s32.totalorder %s21, 1
      %p65 = por %p63, %p64
      %p67 = scmp.ne.s32.totalorder %s50, %s66
      %p68 = scmp.eq.s32.totalorder %s21, 0
      %p69 = por %p67, %p68
      %s70 = ssub.s32 %s15, %s22
      %p71 = scmp.eq.s32.totalorder %s70, 0
      %s73 = sadd.s32 %s72, 1
      %s74 = scalar_select %p71, %s72, %s73
      %p77 = pneg %p71
      %p78 = scmp.eq.s32.totalorder %s15, 1
      %p79 = por %p77, %p78
      %p80 = scmp.ne.s32.totalorder %s72, %s75
      %p81 = scmp.eq.s32.totalorder %s15, 0
      %p82 = por %p80, %p81
      %p83 = scmp.ne.s32.totalorder %s72, %s75
      %p84 = scmp.eq.s32.totalorder %s20, 1
      %p85 = por %p83, %p84
      %p86 = scmp.ne.s32.totalorder %s75, %s76
      %p87 = scmp.eq.s32.totalorder %s20, 0
      %p88 = por %p86, %p87
      %p89 = scmp.ne.s32.totalorder %s75, %s76
      %p90 = scmp.eq.s32.totalorder %s21, 1
      %p91 = por %p89, %p90
      %p93 = scmp.ne.s32.totalorder %s76, %s92
      %p94 = scmp.eq.s32.totalorder %s21, 0
      %p95 = por %p93, %p94
      %p96 = scmp.le.s32.totalorder 1, %s15
      %p97 = scmp.lt.s32.totalorder %s15, 3
      %p98 = pnand %p96, %p97
      %p99 = pneg %p98
      // Predicated region
      $region9: #{tpu_custom_call.1} parent=5 // pred_check
        _
      $region10: #{tpu_custom_call.1} parent=5 // pred_check_branch
        %101 = sbr.rel (%p98) target = $region12
      $region11: #{tpu_custom_call.1} parent=5 // pred_region
        %s102 = ssub.s32 %s15, 1
        // Predicated region
        $region13: #{tpu_custom_call.1} parent=11 // pred_check
          %p103 = pneg %p36
        $region14: #{tpu_custom_call.1} parent=11 // pred_check_branch
          %105 = sbr.rel (%p103) target = $region16
        $region15: #{tpu_custom_call.1} parent=11 // pred_region
          %107 = vsyncadd [#allocation3], 0
          %s109 = sshll.u32 %s0, 4
          %s110 = int_to_ptr.hbm [resolvable:$true] %s109
          %s111 = sshll.u32 [#allocation2], 4
          %s112 = int_to_ptr.vmem [resolvable:$true] %s111
          %114 = dma.hbm_to_vmem [thread:$0]  %s110, 512, %s112, [#allocation3]
        $region16: #{tpu_custom_call.1} parent=11 // pred_fallthru
          _
      $region12: #{tpu_custom_call.1} parent=5 // pred_fallthru
        _
      %p115 = scmp.lt.s32.totalorder %s15, 2
      // Predicated region
      $region17: #{tpu_custom_call.1} parent=5 // pred_check
        %p116 = pneg %p115
      $region18: #{tpu_custom_call.1} parent=5 // pred_check_branch
        %118 = sbr.rel (%p116) target = $region20
      $region19: #{tpu_custom_call.1} parent=5 // pred_region
        // Predicated region
        $region21: #{tpu_custom_call.1} parent=19 // pred_check
          %p119 = pneg %p56
        $region22: #{tpu_custom_call.1} parent=19 // pred_check_branch
          %121 = sbr.rel (%p119) target = $region24
        $region23: #{tpu_custom_call.1} parent=19 // pred_region
          %s122 = sand.u32 %s46, 1
          %s123 = scalar_lea.sflag [#allocation6], %s122
          %s124 = sand.u32 %s46, 1
          %s125 = smul.addr %s124, 2048
          %s126 = scalar_lea.vmem [#allocation5], %s125
          %s127 = smul.u32 64, %s15
          %129 = vsyncadd %s123, 0
          %s130 = smul.addr %s127, 4
          %s131 = smul.addr %s130, 8
          %s132 = scalar_lea.hbm %s1, %s131
          %s133 = sshll.u32 %s132, 4
          %s134 = int_to_ptr.hbm [resolvable:$true] %s133
          %s135 = sshll.u32 %s126, 4
          %s136 = int_to_ptr.vmem [resolvable:$true] %s135
          %141 = dma.hbm_to_vmem [thread:$0]  %s134, 32768, %s136, %s123, 512, 512, 32
        $region24: #{tpu_custom_call.1} parent=19 // pred_fallthru
          _
      $region20: #{tpu_custom_call.1} parent=5 // pred_fallthru
        _
      %p142 = scmp.le.s32.totalorder 1, %s15
      %p143 = scmp.lt.s32.totalorder %s15, 3
      %p144 = pnand %p142, %p143
      %p145 = pneg %p144
      // Predicated region
      $region25: #{tpu_custom_call.1} parent=5 // pred_check
        _
      $region26: #{tpu_custom_call.1} parent=5 // pred_check_branch
        %147 = sbr.rel (%p144) target = $region28
      $region27: #{tpu_custom_call.1} parent=5 // pred_region
        %s148 = ssub.s32 %s15, 1
        // Predicated region
        $region29: #{tpu_custom_call.1} parent=27 // pred_check
          %p149 = pneg %p36
        $region30: #{tpu_custom_call.1} parent=27 // pred_check_branch
          %151 = sbr.rel (%p149) target = $region32
        $region31: #{tpu_custom_call.1} parent=27 // pred_region
          %153 = dma.done [#allocation3], 512
        $region32: #{tpu_custom_call.1} parent=27 // pred_fallthru
          _
        %s154 = sand.u32 %s49, 1
        %s155 = scalar_lea.sflag [#allocation6], %s154
        %s156 = sand.u32 %s49, 1
        %s157 = smul.addr %s156, 2048
        %s158 = scalar_lea.vmem [#allocation5], %s157
        // Predicated region
        $region33: #{tpu_custom_call.1} parent=27 // pred_check
          %p159 = pneg %p62
        $region34: #{tpu_custom_call.1} parent=27 // pred_check_branch
          %161 = sbr.rel (%p159) target = $region36
        $region35: #{tpu_custom_call.1} parent=27 // pred_region
          %163 = dma.done %s155, 32768
        $region36: #{tpu_custom_call.1} parent=27 // pred_fallthru
          _
        %p164 = pneg %p36
        %p165 = pneg %p33
        %s166 = sand.u32 %s49, 1
        %s167 = scalar_lea.sflag [#allocation6], %s166
        %s168 = sand.u32 %s49, 1
        %s169 = smul.addr %s168, 2048
        %s170 = scalar_lea.vmem [#allocation5], %s169
        %p171 = pneg %p62
        %p172 = pneg %p59
        %p173 = pneg %p88
        %p174 = pneg %p85
        %s175 = sand.u32 %s75, 1
        %s176 = scalar_lea.sflag [#allocation4], %s175
        %s177 = sand.u32 %s75, 1
        %s178 = smul.addr %s177, 32
        %s179 = scalar_lea.vmem [#allocation7], %s178
        %s180 = smul.u32 64, %s20
        %s181 = smul.u32 4, %s20
        %v182 = vld [vmem:[#allocation2] sm:$0xff]
        %v183 = vld [vmem:[#allocation2 + $0x8] sm:$0xff]
        %v184 = vld [vmem:[#allocation2 + $0x10] sm:$0xff]
        %v185 = vld [vmem:[#allocation2 + $0x18] sm:$0xff]
        %v186 = vld [vmem:[%s158] sm:$0xff]
        %v187 = vld [vmem:[%s158 + $0x8] sm:$0xff]
        %v188 = vld [vmem:[%s158 + $0x10] sm:$0xff]
        %v189 = vld [vmem:[%s158 + $0x18] sm:$0xff]
        %v190 = vld [vmem:[%s158 + $0x20] sm:$0xff]
        %v191 = vld [vmem:[%s158 + $0x28] sm:$0xff]
        %v192 = vld [vmem:[%s158 + $0x30] sm:$0xff]
        %v193 = vld [vmem:[%s158 + $0x38] sm:$0xff]
        %v194 = vld [vmem:[%s158 + $0x40] sm:$0xff]
        %v195 = vld [vmem:[%s158 + $0x48] sm:$0xff]
        %v196 = vld [vmem:[%s158 + $0x50] sm:$0xff]
        %v197 = vld [vmem:[%s158 + $0x58] sm:$0xff]
        %v198 = vld [vmem:[%s158 + $0x60] sm:$0xff]
        %v199 = vld [vmem:[%s158 + $0x68] sm:$0xff]
        %v200 = vld [vmem:[%s158 + $0x70] sm:$0xff]
        %v201 = vld [vmem:[%s158 + $0x78] sm:$0xff]
        %v202 = vld [vmem:[%s158 + $0x80] sm:$0xff]
        %v203 = vld [vmem:[%s158 + $0x88] sm:$0xff]
        %v204 = vld [vmem:[%s158 + $0x90] sm:$0xff]
        %v205 = vld [vmem:[%s158 + $0x98] sm:$0xff]
        %v206 = vld [vmem:[%s158 + $0xa0] sm:$0xff]
        %v207 = vld [vmem:[%s158 + $0xa8] sm:$0xff]
        %v208 = vld [vmem:[%s158 + $0xb0] sm:$0xff]
        %v209 = vld [vmem:[%s158 + $0xb8] sm:$0xff]
        %v210 = vld [vmem:[%s158 + $0xc0] sm:$0xff]
        %v211 = vld [vmem:[%s158 + $0xc8] sm:$0xff]
        %v212 = vld [vmem:[%s158 + $0xd0] sm:$0xff]
        %v213 = vld [vmem:[%s158 + $0xd8] sm:$0xff]
        %v214 = vld [vmem:[%s158 + $0xe0] sm:$0xff]
        %v215 = vld [vmem:[%s158 + $0xe8] sm:$0xff]
        %v216 = vld [vmem:[%s158 + $0xf0] sm:$0xff]
        %v217 = vld [vmem:[%s158 + $0xf8] sm:$0xff]
        %v218 = vld [vmem:[%s158 + $0x100] sm:$0xff]
        %v219 = vld [vmem:[%s158 + $0x108] sm:$0xff]
        %v220 = vld [vmem:[%s158 + $0x110] sm:$0xff]
        %v221 = vld [vmem:[%s158 + $0x118] sm:$0xff]
        %v222 = vld [vmem:[%s158 + $0x120] sm:$0xff]
        %v223 = vld [vmem:[%s158 + $0x128] sm:$0xff]
        %v224 = vld [vmem:[%s158 + $0x130] sm:$0xff]
        %v225 = vld [vmem:[%s158 + $0x138] sm:$0xff]
        %v226 = vld [vmem:[%s158 + $0x140] sm:$0xff]
        %v227 = vld [vmem:[%s158 + $0x148] sm:$0xff]
        %v228 = vld [vmem:[%s158 + $0x150] sm:$0xff]
        %v229 = vld [vmem:[%s158 + $0x158] sm:$0xff]
        %v230 = vld [vmem:[%s158 + $0x160] sm:$0xff]
        %v231 = vld [vmem:[%s158 + $0x168] sm:$0xff]
        %v232 = vld [vmem:[%s158 + $0x170] sm:$0xff]
        %v233 = vld [vmem:[%s158 + $0x178] sm:$0xff]
        %v234 = vld [vmem:[%s158 + $0x180] sm:$0xff]
        %v235 = vld [vmem:[%s158 + $0x188] sm:$0xff]
        %v236 = vld [vmem:[%s158 + $0x190] sm:$0xff]
        %v237 = vld [vmem:[%s158 + $0x198] sm:$0xff]
        %v238 = vld [vmem:[%s158 + $0x1a0] sm:$0xff]
        %v239 = vld [vmem:[%s158 + $0x1a8] sm:$0xff]
        %v240 = vld [vmem:[%s158 + $0x1b0] sm:$0xff]
        %v241 = vld [vmem:[%s158 + $0x1b8] sm:$0xff]
        %v242 = vld [vmem:[%s158 + $0x1c0] sm:$0xff]
        %v243 = vld [vmem:[%s158 + $0x1c8] sm:$0xff]
        %v244 = vld [vmem:[%s158 + $0x1d0] sm:$0xff]
        %v245 = vld [vmem:[%s158 + $0x1d8] sm:$0xff]
        %v246 = vld [vmem:[%s158 + $0x1e0] sm:$0xff]
        %v247 = vld [vmem:[%s158 + $0x1e8] sm:$0xff]
        %v248 = vld [vmem:[%s158 + $0x1f0] sm:$0xff]
        %v249 = vld [vmem:[%s158 + $0x1f8] sm:$0xff]
        %v250 = vld [vmem:[%s158 + $0x200] sm:$0xff]
        %v251 = vld [vmem:[%s158 + $0x208] sm:$0xff]
        %v252 = vld [vmem:[%s158 + $0x210] sm:$0xff]
        %v253 = vld [vmem:[%s158 + $0x218] sm:$0xff]
        %v254 = vld [vmem:[%s158 + $0x220] sm:$0xff]
        %v255 = vld [vmem:[%s158 + $0x228] sm:$0xff]
        %v256 = vld [vmem:[%s158 + $0x230] sm:$0xff]
        %v257 = vld [vmem:[%s158 + $0x238] sm:$0xff]
        %v258 = vld [vmem:[%s158 + $0x240] sm:$0xff]
        %v259 = vld [vmem:[%s158 + $0x248] sm:$0xff]
        %v260 = vld [vmem:[%s158 + $0x250] sm:$0xff]
        %v261 = vld [vmem:[%s158 + $0x258] sm:$0xff]
        %v262 = vld [vmem:[%s158 + $0x260] sm:$0xff]
        %v263 = vld [vmem:[%s158 + $0x268] sm:$0xff]
        %v264 = vld [vmem:[%s158 + $0x270] sm:$0xff]
        %v265 = vld [vmem:[%s158 + $0x278] sm:$0xff]
        %v266 = vld [vmem:[%s158 + $0x280] sm:$0xff]
        %v267 = vld [vmem:[%s158 + $0x288] sm:$0xff]
        %v268 = vld [vmem:[%s158 + $0x290] sm:$0xff]
        %v269 = vld [vmem:[%s158 + $0x298] sm:$0xff]
        %v270 = vld [vmem:[%s158 + $0x2a0] sm:$0xff]
        %v271 = vld [vmem:[%s158 + $0x2a8] sm:$0xff]
        %v272 = vld [vmem:[%s158 + $0x2b0] sm:$0xff]
        %v273 = vld [vmem:[%s158 + $0x2b8] sm:$0xff]
        %v274 = vld [vmem:[%s158 + $0x2c0] sm:$0xff]
        %v275 = vld [vmem:[%s158 + $0x2c8] sm:$0xff]
        %v276 = vld [vmem:[%s158 + $0x2d0] sm:$0xff]
        %v277 = vld [vmem:[%s158 + $0x2d8] sm:$0xff]
        %v278 = vld [vmem:[%s158 + $0x2e0] sm:$0xff]
        %v279 = vld [vmem:[%s158 + $0x2e8] sm:$0xff]
        %v280 = vld [vmem:[%s158 + $0x2f0] sm:$0xff]
        %v281 = vld [vmem:[%s158 + $0x2f8] sm:$0xff]
        %v282 = vld [vmem:[%s158 + $0x300] sm:$0xff]
        %v283 = vld [vmem:[%s158 + $0x308] sm:$0xff]
        %v284 = vld [vmem:[%s158 + $0x310] sm:$0xff]
        %v285 = vld [vmem:[%s158 + $0x318] sm:$0xff]
        %v286 = vld [vmem:[%s158 + $0x320] sm:$0xff]
        %v287 = vld [vmem:[%s158 + $0x328] sm:$0xff]
        %v288 = vld [vmem:[%s158 + $0x330] sm:$0xff]
        %v289 = vld [vmem:[%s158 + $0x338] sm:$0xff]
        %v290 = vld [vmem:[%s158 + $0x340] sm:$0xff]
        %v291 = vld [vmem:[%s158 + $0x348] sm:$0xff]
        %v292 = vld [vmem:[%s158 + $0x350] sm:$0xff]
        %v293 = vld [vmem:[%s158 + $0x358] sm:$0xff]
        %v294 = vld [vmem:[%s158 + $0x360] sm:$0xff]
        %v295 = vld [vmem:[%s158 + $0x368] sm:$0xff]
        %v296 = vld [vmem:[%s158 + $0x370] sm:$0xff]
        %v297 = vld [vmem:[%s158 + $0x378] sm:$0xff]
        %v298 = vld [vmem:[%s158 + $0x380] sm:$0xff]
        %v299 = vld [vmem:[%s158 + $0x388] sm:$0xff]
        %v300 = vld [vmem:[%s158 + $0x390] sm:$0xff]
        %v301 = vld [vmem:[%s158 + $0x398] sm:$0xff]
        %v302 = vld [vmem:[%s158 + $0x3a0] sm:$0xff]
        %v303 = vld [vmem:[%s158 + $0x3a8] sm:$0xff]
        %v304 = vld [vmem:[%s158 + $0x3b0] sm:$0xff]
        %v305 = vld [vmem:[%s158 + $0x3b8] sm:$0xff]
        %v306 = vld [vmem:[%s158 + $0x3c0] sm:$0xff]
        %v307 = vld [vmem:[%s158 + $0x3c8] sm:$0xff]
        %v308 = vld [vmem:[%s158 + $0x3d0] sm:$0xff]
        %v309 = vld [vmem:[%s158 + $0x3d8] sm:$0xff]
        %v310 = vld [vmem:[%s158 + $0x3e0] sm:$0xff]
        %v311 = vld [vmem:[%s158 + $0x3e8] sm:$0xff]
        %v312 = vld [vmem:[%s158 + $0x3f0] sm:$0xff]
        %v313 = vld [vmem:[%s158 + $0x3f8] sm:$0xff]
        %v314 = vld [vmem:[%s158 + $0x400] sm:$0xff]
        %v315 = vld [vmem:[%s158 + $0x408] sm:$0xff]
        %v316 = vld [vmem:[%s158 + $0x410] sm:$0xff]
        %v317 = vld [vmem:[%s158 + $0x418] sm:$0xff]
        %v318 = vld [vmem:[%s158 + $0x420] sm:$0xff]
        %v319 = vld [vmem:[%s158 + $0x428] sm:$0xff]
        %v320 = vld [vmem:[%s158 + $0x430] sm:$0xff]
        %v321 = vld [vmem:[%s158 + $0x438] sm:$0xff]
        %v322 = vld [vmem:[%s158 + $0x440] sm:$0xff]
        %v323 = vld [vmem:[%s158 + $0x448] sm:$0xff]
        %v324 = vld [vmem:[%s158 + $0x450] sm:$0xff]
        %v325 = vld [vmem:[%s158 + $0x458] sm:$0xff]
        %v326 = vld [vmem:[%s158 + $0x460] sm:$0xff]
        %v327 = vld [vmem:[%s158 + $0x468] sm:$0xff]
        %v328 = vld [vmem:[%s158 + $0x470] sm:$0xff]
        %v329 = vld [vmem:[%s158 + $0x478] sm:$0xff]
        %v330 = vld [vmem:[%s158 + $0x480] sm:$0xff]
        %v331 = vld [vmem:[%s158 + $0x488] sm:$0xff]
        %v332 = vld [vmem:[%s158 + $0x490] sm:$0xff]
        %v333 = vld [vmem:[%s158 + $0x498] sm:$0xff]
        %v334 = vld [vmem:[%s158 + $0x4a0] sm:$0xff]
        %v335 = vld [vmem:[%s158 + $0x4a8] sm:$0xff]
        %v336 = vld [vmem:[%s158 + $0x4b0] sm:$0xff]
        %v337 = vld [vmem:[%s158 + $0x4b8] sm:$0xff]
        %v338 = vld [vmem:[%s158 + $0x4c0] sm:$0xff]
        %v339 = vld [vmem:[%s158 + $0x4c8] sm:$0xff]
        %v340 = vld [vmem:[%s158 + $0x4d0] sm:$0xff]
        %v341 = vld [vmem:[%s158 + $0x4d8] sm:$0xff]
        %v342 = vld [vmem:[%s158 + $0x4e0] sm:$0xff]
        %v343 = vld [vmem:[%s158 + $0x4e8] sm:$0xff]
        %v344 = vld [vmem:[%s158 + $0x4f0] sm:$0xff]
        %v345 = vld [vmem:[%s158 + $0x4f8] sm:$0xff]
        %v346 = vld [vmem:[%s158 + $0x500] sm:$0xff]
        %v347 = vld [vmem:[%s158 + $0x508] sm:$0xff]
        %v348 = vld [vmem:[%s158 + $0x510] sm:$0xff]
        %v349 = vld [vmem:[%s158 + $0x518] sm:$0xff]
        %v350 = vld [vmem:[%s158 + $0x520] sm:$0xff]
        %v351 = vld [vmem:[%s158 + $0x528] sm:$0xff]
        %v352 = vld [vmem:[%s158 + $0x530] sm:$0xff]
        %v353 = vld [vmem:[%s158 + $0x538] sm:$0xff]
        %v354 = vld [vmem:[%s158 + $0x540] sm:$0xff]
        %v355 = vld [vmem:[%s158 + $0x548] sm:$0xff]
        %v356 = vld [vmem:[%s158 + $0x550] sm:$0xff]
        %v357 = vld [vmem:[%s158 + $0x558] sm:$0xff]
        %v358 = vld [vmem:[%s158 + $0x560] sm:$0xff]
        %v359 = vld [vmem:[%s158 + $0x568] sm:$0xff]
        %v360 = vld [vmem:[%s158 + $0x570] sm:$0xff]
        %v361 = vld [vmem:[%s158 + $0x578] sm:$0xff]
        %v362 = vld [vmem:[%s158 + $0x580] sm:$0xff]
        %v363 = vld [vmem:[%s158 + $0x588] sm:$0xff]
        %v364 = vld [vmem:[%s158 + $0x590] sm:$0xff]
        %v365 = vld [vmem:[%s158 + $0x598] sm:$0xff]
        %v366 = vld [vmem:[%s158 + $0x5a0] sm:$0xff]
        %v367 = vld [vmem:[%s158 + $0x5a8] sm:$0xff]
        %v368 = vld [vmem:[%s158 + $0x5b0] sm:$0xff]
        %v369 = vld [vmem:[%s158 + $0x5b8] sm:$0xff]
        %v370 = vld [vmem:[%s158 + $0x5c0] sm:$0xff]
        %v371 = vld [vmem:[%s158 + $0x5c8] sm:$0xff]
        %v372 = vld [vmem:[%s158 + $0x5d0] sm:$0xff]
        %v373 = vld [vmem:[%s158 + $0x5d8] sm:$0xff]
        %v374 = vld [vmem:[%s158 + $0x5e0] sm:$0xff]
        %v375 = vld [vmem:[%s158 + $0x5e8] sm:$0xff]
        %v376 = vld [vmem:[%s158 + $0x5f0] sm:$0xff]
        %v377 = vld [vmem:[%s158 + $0x5f8] sm:$0xff]
        %v378 = vld [vmem:[%s158 + $0x600] sm:$0xff]
        %v379 = vld [vmem:[%s158 + $0x608] sm:$0xff]
        %v380 = vld [vmem:[%s158 + $0x610] sm:$0xff]
        %v381 = vld [vmem:[%s158 + $0x618] sm:$0xff]
        %v382 = vld [vmem:[%s158 + $0x620] sm:$0xff]
        %v383 = vld [vmem:[%s158 + $0x628] sm:$0xff]
        %v384 = vld [vmem:[%s158 + $0x630] sm:$0xff]
        %v385 = vld [vmem:[%s158 + $0x638] sm:$0xff]
        %v386 = vld [vmem:[%s158 + $0x640] sm:$0xff]
        %v387 = vld [vmem:[%s158 + $0x648] sm:$0xff]
        %v388 = vld [vmem:[%s158 + $0x650] sm:$0xff]
        %v389 = vld [vmem:[%s158 + $0x658] sm:$0xff]
        %v390 = vld [vmem:[%s158 + $0x660] sm:$0xff]
        %v391 = vld [vmem:[%s158 + $0x668] sm:$0xff]
        %v392 = vld [vmem:[%s158 + $0x670] sm:$0xff]
        %v393 = vld [vmem:[%s158 + $0x678] sm:$0xff]
        %v394 = vld [vmem:[%s158 + $0x680] sm:$0xff]
        %v395 = vld [vmem:[%s158 + $0x688] sm:$0xff]
        %v396 = vld [vmem:[%s158 + $0x690] sm:$0xff]
        %v397 = vld [vmem:[%s158 + $0x698] sm:$0xff]
        %v398 = vld [vmem:[%s158 + $0x6a0] sm:$0xff]
        %v399 = vld [vmem:[%s158 + $0x6a8] sm:$0xff]
        %v400 = vld [vmem:[%s158 + $0x6b0] sm:$0xff]
        %v401 = vld [vmem:[%s158 + $0x6b8] sm:$0xff]
        %v402 = vld [vmem:[%s158 + $0x6c0] sm:$0xff]
        %v403 = vld [vmem:[%s158 + $0x6c8] sm:$0xff]
        %v404 = vld [vmem:[%s158 + $0x6d0] sm:$0xff]
        %v405 = vld [vmem:[%s158 + $0x6d8] sm:$0xff]
        %v406 = vld [vmem:[%s158 + $0x6e0] sm:$0xff]
        %v407 = vld [vmem:[%s158 + $0x6e8] sm:$0xff]
        %v408 = vld [vmem:[%s158 + $0x6f0] sm:$0xff]
        %v409 = vld [vmem:[%s158 + $0x6f8] sm:$0xff]
        %v410 = vld [vmem:[%s158 + $0x700] sm:$0xff]
        %v411 = vld [vmem:[%s158 + $0x708] sm:$0xff]
        %v412 = vld [vmem:[%s158 + $0x710] sm:$0xff]
        %v413 = vld [vmem:[%s158 + $0x718] sm:$0xff]
        %v414 = vld [vmem:[%s158 + $0x720] sm:$0xff]
        %v415 = vld [vmem:[%s158 + $0x728] sm:$0xff]
        %v416 = vld [vmem:[%s158 + $0x730] sm:$0xff]
        %v417 = vld [vmem:[%s158 + $0x738] sm:$0xff]
        %v418 = vld [vmem:[%s158 + $0x740] sm:$0xff]
        %v419 = vld [vmem:[%s158 + $0x748] sm:$0xff]
        %v420 = vld [vmem:[%s158 + $0x750] sm:$0xff]
        %v421 = vld [vmem:[%s158 + $0x758] sm:$0xff]
        %v422 = vld [vmem:[%s158 + $0x760] sm:$0xff]
        %v423 = vld [vmem:[%s158 + $0x768] sm:$0xff]
        %v424 = vld [vmem:[%s158 + $0x770] sm:$0xff]
        %v425 = vld [vmem:[%s158 + $0x778] sm:$0xff]
        %v426 = vld [vmem:[%s158 + $0x780] sm:$0xff]
        %v427 = vld [vmem:[%s158 + $0x788] sm:$0xff]
        %v428 = vld [vmem:[%s158 + $0x790] sm:$0xff]
        %v429 = vld [vmem:[%s158 + $0x798] sm:$0xff]
        %v430 = vld [vmem:[%s158 + $0x7a0] sm:$0xff]
        %v431 = vld [vmem:[%s158 + $0x7a8] sm:$0xff]
        %v432 = vld [vmem:[%s158 + $0x7b0] sm:$0xff]
        %v433 = vld [vmem:[%s158 + $0x7b8] sm:$0xff]
        %v434 = vld [vmem:[%s158 + $0x7c0] sm:$0xff]
        %v435 = vld [vmem:[%s158 + $0x7c8] sm:$0xff]
        %v436 = vld [vmem:[%s158 + $0x7d0] sm:$0xff]
        %v437 = vld [vmem:[%s158 + $0x7d8] sm:$0xff]
        %v438 = vld [vmem:[%s158 + $0x7e0] sm:$0xff]
        %v439 = vld [vmem:[%s158 + $0x7e8] sm:$0xff]
        %v440 = vld [vmem:[%s158 + $0x7f0] sm:$0xff]
        %v441 = vld [vmem:[%s158 + $0x7f8] sm:$0xff]
        %442 = vmatpush.xpose.msra.mxu0 %v246
        %443 = vmatpush.xpose.msra.mxu0 %v242
        %444 = vmatpush.xpose.msra.mxu0 %v238
        %445 = vmatpush.xpose.msra.mxu0 %v234
        %446 = vmatpush.xpose.msra.mxu0 %v230
        %447 = vmatpush.xpose.msra.mxu0 %v226
        %448 = vmatpush.xpose.msra.mxu0 %v222
        %449 = vmatpush.xpose.msra.mxu0 %v218
        %450 = vmatpush.xpose.msra.mxu0 %v214
        %451 = vmatpush.xpose.msra.mxu0 %v210
        %452 = vmatpush.xpose.msra.mxu0 %v206
        %453 = vmatpush.xpose.msra.mxu0 %v202
        %454 = vmatpush.xpose.msra.mxu0 %v198
        %455 = vmatpush.xpose.msra.mxu0 %v194
        %456 = vmatpush.xpose.msra.mxu0 %v190
        %457 = vmatpush.xpose.msra.mxu0 %v186
        %458 = vmatmul.f32.gmra.mxu0 %v182
        %v459 = vpop.f32.mrf.mxu0
        %v460 = vadd.f32 0.0, %v459
        %461 = vdwg.mxu0
        %462 = vmatpush.xpose.msra.mxu0 %v247
        %463 = vmatpush.xpose.msra.mxu0 %v243
        %464 = vmatpush.xpose.msra.mxu0 %v239
        %465 = vmatpush.xpose.msra.mxu0 %v235
        %466 = vmatpush.xpose.msra.mxu0 %v231
        %467 = vmatpush.xpose.msra.mxu0 %v227
        %468 = vmatpush.xpose.msra.mxu0 %v223
        %469 = vmatpush.xpose.msra.mxu0 %v219
        %470 = vmatpush.xpose.msra.mxu0 %v215
        %471 = vmatpush.xpose.msra.mxu0 %v211
        %472 = vmatpush.xpose.msra.mxu0 %v207
        %473 = vmatpush.xpose.msra.mxu0 %v203
        %474 = vmatpush.xpose.msra.mxu0 %v199
        %475 = vmatpush.xpose.msra.mxu0 %v195
        %476 = vmatpush.xpose.msra.mxu0 %v191
        %477 = vmatpush.xpose.msra.mxu0 %v187
        %478 = vmatmul.f32.gmra.mxu0 %v183
        %v479 = vpop.f32.mrf.mxu0
        %v480 = vadd.f32 %v460, %v479
        %481 = vdwg.mxu0
        %482 = vmatpush.xpose.msra.mxu0 %v248
        %483 = vmatpush.xpose.msra.mxu0 %v244
        %484 = vmatpush.xpose.msra.mxu0 %v240
        %485 = vmatpush.xpose.msra.mxu0 %v236
        %486 = vmatpush.xpose.msra.mxu0 %v232
        %487 = vmatpush.xpose.msra.mxu0 %v228
        %488 = vmatpush.xpose.msra.mxu0 %v224
        %489 = vmatpush.xpose.msra.mxu0 %v220
        %490 = vmatpush.xpose.msra.mxu0 %v216
        %491 = vmatpush.xpose.msra.mxu0 %v212
        %492 = vmatpush.xpose.msra.mxu0 %v208
        %493 = vmatpush.xpose.msra.mxu0 %v204
        %494 = vmatpush.xpose.msra.mxu0 %v200
        %495 = vmatpush.xpose.msra.mxu0 %v196
        %496 = vmatpush.xpose.msra.mxu0 %v192
        %497 = vmatpush.xpose.msra.mxu0 %v188
        %498 = vmatmul.f32.gmra.mxu0 %v184
        %v499 = vpop.f32.mrf.mxu0
        %v500 = vadd.f32 %v480, %v499
        %501 = vdwg.mxu0
        %502 = vmatpush.xpose.msra.mxu0 %v249
        %503 = vmatpush.xpose.msra.mxu0 %v245
        %504 = vmatpush.xpose.msra.mxu0 %v241
        %505 = vmatpush.xpose.msra.mxu0 %v237
        %506 = vmatpush.xpose.msra.mxu0 %v233
        %507 = vmatpush.xpose.msra.mxu0 %v229
        %508 = vmatpush.xpose.msra.mxu0 %v225
        %509 = vmatpush.xpose.msra.mxu0 %v221
        %510 = vmatpush.xpose.msra.mxu0 %v217
        %511 = vmatpush.xpose.msra.mxu0 %v213
        %512 = vmatpush.xpose.msra.mxu0 %v209
        %513 = vmatpush.xpose.msra.mxu0 %v205
        %514 = vmatpush.xpose.msra.mxu0 %v201
        %515 = vmatpush.xpose.msra.mxu0 %v197
        %516 = vmatpush.xpose.msra.mxu0 %v193
        %517 = vmatpush.xpose.msra.mxu0 %v189
        %518 = vmatmul.f32.gmra.mxu0 %v185
        %v519 = vpop.f32.mrf.mxu0
        %v520 = vadd.f32 %v500, %v519
        %521 = vdwg.mxu0
        %522 = vmatpush.xpose.msra.mxu0 %v310
        %523 = vmatpush.xpose.msra.mxu0 %v306
        %524 = vmatpush.xpose.msra.mxu0 %v302
        %525 = vmatpush.xpose.msra.mxu0 %v298
        %526 = vmatpush.xpose.msra.mxu0 %v294
        %527 = vmatpush.xpose.msra.mxu0 %v290
        %528 = vmatpush.xpose.msra.mxu0 %v286
        %529 = vmatpush.xpose.msra.mxu0 %v282
        %530 = vmatpush.xpose.msra.mxu0 %v278
        %531 = vmatpush.xpose.msra.mxu0 %v274
        %532 = vmatpush.xpose.msra.mxu0 %v270
        %533 = vmatpush.xpose.msra.mxu0 %v266
        %534 = vmatpush.xpose.msra.mxu0 %v262
        %535 = vmatpush.xpose.msra.mxu0 %v258
        %536 = vmatpush.xpose.msra.mxu0 %v254
        %537 = vmatpush.xpose.msra.mxu0 %v250
        %538 = vmatmul.f32.gmra.mxu0 %v182
        %v539 = vpop.f32.mrf.mxu0
        %v540 = vadd.f32 0.0, %v539
        %541 = vdwg.mxu0
        %542 = vmatpush.xpose.msra.mxu0 %v311
        %543 = vmatpush.xpose.msra.mxu0 %v307
        %544 = vmatpush.xpose.msra.mxu0 %v303
        %545 = vmatpush.xpose.msra.mxu0 %v299
        %546 = vmatpush.xpose.msra.mxu0 %v295
        %547 = vmatpush.xpose.msra.mxu0 %v291
        %548 = vmatpush.xpose.msra.mxu0 %v287
        %549 = vmatpush.xpose.msra.mxu0 %v283
        %550 = vmatpush.xpose.msra.mxu0 %v279
        %551 = vmatpush.xpose.msra.mxu0 %v275
        %552 = vmatpush.xpose.msra.mxu0 %v271
        %553 = vmatpush.xpose.msra.mxu0 %v267
        %554 = vmatpush.xpose.msra.mxu0 %v263
        %555 = vmatpush.xpose.msra.mxu0 %v259
        %556 = vmatpush.xpose.msra.mxu0 %v255
        %557 = vmatpush.xpose.msra.mxu0 %v251
        %558 = vmatmul.f32.gmra.mxu0 %v183
        %v559 = vpop.f32.mrf.mxu0
        %v560 = vadd.f32 %v540, %v559
        %561 = vdwg.mxu0
        %562 = vmatpush.xpose.msra.mxu0 %v312
        %563 = vmatpush.xpose.msra.mxu0 %v308
        %564 = vmatpush.xpose.msra.mxu0 %v304
        %565 = vmatpush.xpose.msra.mxu0 %v300
        %566 = vmatpush.xpose.msra.mxu0 %v296
        %567 = vmatpush.xpose.msra.mxu0 %v292
        %568 = vmatpush.xpose.msra.mxu0 %v288
        %569 = vmatpush.xpose.msra.mxu0 %v284
        %570 = vmatpush.xpose.msra.mxu0 %v280
        %571 = vmatpush.xpose.msra.mxu0 %v276
        %572 = vmatpush.xpose.msra.mxu0 %v272
        %573 = vmatpush.xpose.msra.mxu0 %v268
        %574 = vmatpush.xpose.msra.mxu0 %v264
        %575 = vmatpush.xpose.msra.mxu0 %v260
        %576 = vmatpush.xpose.msra.mxu0 %v256
        %577 = vmatpush.xpose.msra.mxu0 %v252
        %578 = vmatmul.f32.gmra.mxu0 %v184
        %v579 = vpop.f32.mrf.mxu0
        %v580 = vadd.f32 %v560, %v579
        %581 = vdwg.mxu0
        %582 = vmatpush.xpose.msra.mxu0 %v313
        %583 = vmatpush.xpose.msra.mxu0 %v309
        %584 = vmatpush.xpose.msra.mxu0 %v305
        %585 = vmatpush.xpose.msra.mxu0 %v301
        %586 = vmatpush.xpose.msra.mxu0 %v297
        %587 = vmatpush.xpose.msra.mxu0 %v293
        %588 = vmatpush.xpose.msra.mxu0 %v289
        %589 = vmatpush.xpose.msra.mxu0 %v285
        %590 = vmatpush.xpose.msra.mxu0 %v281
        %591 = vmatpush.xpose.msra.mxu0 %v277
        %592 = vmatpush.xpose.msra.mxu0 %v273
        %593 = vmatpush.xpose.msra.mxu0 %v269
        %594 = vmatpush.xpose.msra.mxu0 %v265
        %595 = vmatpush.xpose.msra.mxu0 %v261
        %596 = vmatpush.xpose.msra.mxu0 %v257
        %597 = vmatpush.xpose.msra.mxu0 %v253
        %598 = vmatmul.f32.gmra.mxu0 %v185
        %v599 = vpop.f32.mrf.mxu0
        %v600 = vadd.f32 %v580, %v599
        %601 = vdwg.mxu0
        %602 = vmatpush.xpose.msra.mxu0 %v374
        %603 = vmatpush.xpose.msra.mxu0 %v370
        %604 = vmatpush.xpose.msra.mxu0 %v366
        %605 = vmatpush.xpose.msra.mxu0 %v362
        %606 = vmatpush.xpose.msra.mxu0 %v358
        %607 = vmatpush.xpose.msra.mxu0 %v354
        %608 = vmatpush.xpose.msra.mxu0 %v350
        %609 = vmatpush.xpose.msra.mxu0 %v346
        %610 = vmatpush.xpose.msra.mxu0 %v342
        %611 = vmatpush.xpose.msra.mxu0 %v338
        %612 = vmatpush.xpose.msra.mxu0 %v334
        %613 = vmatpush.xpose.msra.mxu0 %v330
        %614 = vmatpush.xpose.msra.mxu0 %v326
        %615 = vmatpush.xpose.msra.mxu0 %v322
        %616 = vmatpush.xpose.msra.mxu0 %v318
        %617 = vmatpush.xpose.msra.mxu0 %v314
        %618 = vmatmul.f32.gmra.mxu0 %v182
        %v619 = vpop.f32.mrf.mxu0
        %v620 = vadd.f32 0.0, %v619
        %621 = vdwg.mxu0
        %622 = vmatpush.xpose.msra.mxu0 %v375
        %623 = vmatpush.xpose.msra.mxu0 %v371
        %624 = vmatpush.xpose.msra.mxu0 %v367
        %625 = vmatpush.xpose.msra.mxu0 %v363
        %626 = vmatpush.xpose.msra.mxu0 %v359
        %627 = vmatpush.xpose.msra.mxu0 %v355
        %628 = vmatpush.xpose.msra.mxu0 %v351
        %629 = vmatpush.xpose.msra.mxu0 %v347
        %630 = vmatpush.xpose.msra.mxu0 %v343
        %631 = vmatpush.xpose.msra.mxu0 %v339
        %632 = vmatpush.xpose.msra.mxu0 %v335
        %633 = vmatpush.xpose.msra.mxu0 %v331
        %634 = vmatpush.xpose.msra.mxu0 %v327
        %635 = vmatpush.xpose.msra.mxu0 %v323
        %636 = vmatpush.xpose.msra.mxu0 %v319
        %637 = vmatpush.xpose.msra.mxu0 %v315
        %638 = vmatmul.f32.gmra.mxu0 %v183
        %v639 = vpop.f32.mrf.mxu0
        %v640 = vadd.f32 %v620, %v639
        %641 = vdwg.mxu0
        %642 = vmatpush.xpose.msra.mxu0 %v376
        %643 = vmatpush.xpose.msra.mxu0 %v372
        %644 = vmatpush.xpose.msra.mxu0 %v368
        %645 = vmatpush.xpose.msra.mxu0 %v364
        %646 = vmatpush.xpose.msra.mxu0 %v360
        %647 = vmatpush.xpose.msra.mxu0 %v356
        %648 = vmatpush.xpose.msra.mxu0 %v352
        %649 = vmatpush.xpose.msra.mxu0 %v348
        %650 = vmatpush.xpose.msra.mxu0 %v344
        %651 = vmatpush.xpose.msra.mxu0 %v340
        %652 = vmatpush.xpose.msra.mxu0 %v336
        %653 = vmatpush.xpose.msra.mxu0 %v332
        %654 = vmatpush.xpose.msra.mxu0 %v328
        %655 = vmatpush.xpose.msra.mxu0 %v324
        %656 = vmatpush.xpose.msra.mxu0 %v320
        %657 = vmatpush.xpose.msra.mxu0 %v316
        %658 = vmatmul.f32.gmra.mxu0 %v184
        %v659 = vpop.f32.mrf.mxu0
        %v660 = vadd.f32 %v640, %v659
        %661 = vdwg.mxu0
        %662 = vmatpush.xpose.msra.mxu0 %v377
        %663 = vmatpush.xpose.msra.mxu0 %v373
        %664 = vmatpush.xpose.msra.mxu0 %v369
        %665 = vmatpush.xpose.msra.mxu0 %v365
        %666 = vmatpush.xpose.msra.mxu0 %v361
        %667 = vmatpush.xpose.msra.mxu0 %v357
        %668 = vmatpush.xpose.msra.mxu0 %v353
        %669 = vmatpush.xpose.msra.mxu0 %v349
        %670 = vmatpush.xpose.msra.mxu0 %v345
        %671 = vmatpush.xpose.msra.mxu0 %v341
        %672 = vmatpush.xpose.msra.mxu0 %v337
        %673 = vmatpush.xpose.msra.mxu0 %v333
        %674 = vmatpush.xpose.msra.mxu0 %v329
        %675 = vmatpush.xpose.msra.mxu0 %v325
        %676 = vmatpush.xpose.msra.mxu0 %v321
        %677 = vmatpush.xpose.msra.mxu0 %v317
        %678 = vmatmul.f32.gmra.mxu0 %v185
        %v679 = vpop.f32.mrf.mxu0
        %v680 = vadd.f32 %v660, %v679
        %681 = vdwg.mxu0
        %682 = vmatpush.xpose.msra.mxu0 %v438
        %683 = vmatpush.xpose.msra.mxu0 %v434
        %684 = vmatpush.xpose.msra.mxu0 %v430
        %685 = vmatpush.xpose.msra.mxu0 %v426
        %686 = vmatpush.xpose.msra.mxu0 %v422
        %687 = vmatpush.xpose.msra.mxu0 %v418
        %688 = vmatpush.xpose.msra.mxu0 %v414
        %689 = vmatpush.xpose.msra.mxu0 %v410
        %690 = vmatpush.xpose.msra.mxu0 %v406
        %691 = vmatpush.xpose.msra.mxu0 %v402
        %692 = vmatpush.xpose.msra.mxu0 %v398
        %693 = vmatpush.xpose.msra.mxu0 %v394
        %694 = vmatpush.xpose.msra.mxu0 %v390
        %695 = vmatpush.xpose.msra.mxu0 %v386
        %696 = vmatpush.xpose.msra.mxu0 %v382
        %697 = vmatpush.xpose.msra.mxu0 %v378
        %698 = vmatmul.f32.gmra.mxu0 %v182
        %v699 = vpop.f32.mrf.mxu0
        %v700 = vadd.f32 0.0, %v699
        %701 = vdwg.mxu0
        %702 = vmatpush.xpose.msra.mxu0 %v439
        %703 = vmatpush.xpose.msra.mxu0 %v435
        %704 = vmatpush.xpose.msra.mxu0 %v431
        %705 = vmatpush.xpose.msra.mxu0 %v427
        %706 = vmatpush.xpose.msra.mxu0 %v423
        %707 = vmatpush.xpose.msra.mxu0 %v419
        %708 = vmatpush.xpose.msra.mxu0 %v415
        %709 = vmatpush.xpose.msra.mxu0 %v411
        %710 = vmatpush.xpose.msra.mxu0 %v407
        %711 = vmatpush.xpose.msra.mxu0 %v403
        %712 = vmatpush.xpose.msra.mxu0 %v399
        %713 = vmatpush.xpose.msra.mxu0 %v395
        %714 = vmatpush.xpose.msra.mxu0 %v391
        %715 = vmatpush.xpose.msra.mxu0 %v387
        %716 = vmatpush.xpose.msra.mxu0 %v383
        %717 = vmatpush.xpose.msra.mxu0 %v379
        %718 = vmatmul.f32.gmra.mxu0 %v183
        %v719 = vpop.f32.mrf.mxu0
        %v720 = vadd.f32 %v700, %v719
        %721 = vdwg.mxu0
        %722 = vmatpush.xpose.msra.mxu0 %v440
        %723 = vmatpush.xpose.msra.mxu0 %v436
        %724 = vmatpush.xpose.msra.mxu0 %v432
        %725 = vmatpush.xpose.msra.mxu0 %v428
        %726 = vmatpush.xpose.msra.mxu0 %v424
        %727 = vmatpush.xpose.msra.mxu0 %v420
        %728 = vmatpush.xpose.msra.mxu0 %v416
        %729 = vmatpush.xpose.msra.mxu0 %v412
        %730 = vmatpush.xpose.msra.mxu0 %v408
        %731 = vmatpush.xpose.msra.mxu0 %v404
        %732 = vmatpush.xpose.msra.mxu0 %v400
        %733 = vmatpush.xpose.msra.mxu0 %v396
        %734 = vmatpush.xpose.msra.mxu0 %v392
        %735 = vmatpush.xpose.msra.mxu0 %v388
        %736 = vmatpush.xpose.msra.mxu0 %v384
        %737 = vmatpush.xpose.msra.mxu0 %v380
        %738 = vmatmul.f32.gmra.mxu0 %v184
        %v739 = vpop.f32.mrf.mxu0
        %v740 = vadd.f32 %v720, %v739
        %741 = vdwg.mxu0
        %742 = vmatpush.xpose.msra.mxu0 %v441
        %743 = vmatpush.xpose.msra.mxu0 %v437
        %744 = vmatpush.xpose.msra.mxu0 %v433
        %745 = vmatpush.xpose.msra.mxu0 %v429
        %746 = vmatpush.xpose.msra.mxu0 %v425
        %747 = vmatpush.xpose.msra.mxu0 %v421
        %748 = vmatpush.xpose.msra.mxu0 %v417
        %749 = vmatpush.xpose.msra.mxu0 %v413
        %750 = vmatpush.xpose.msra.mxu0 %v409
        %751 = vmatpush.xpose.msra.mxu0 %v405
        %752 = vmatpush.xpose.msra.mxu0 %v401
        %753 = vmatpush.xpose.msra.mxu0 %v397
        %754 = vmatpush.xpose.msra.mxu0 %v393
        %755 = vmatpush.xpose.msra.mxu0 %v389
        %756 = vmatpush.xpose.msra.mxu0 %v385
        %757 = vmatpush.xpose.msra.mxu0 %v381
        %758 = vmatmul.f32.gmra.mxu0 %v185
        %v759 = vpop.f32.mrf.mxu0
        %v760 = vadd.f32 %v740, %v759
        %761 = vdwg.mxu0
        %762 = vst [vmem:[%s179] sm:$0xff] %v520
        %763 = vst [vmem:[%s179 + $0x8] sm:$0xff] %v600
        %764 = vst [vmem:[%s179 + $0x10] sm:$0xff] %v680
        %765 = vst [vmem:[%s179 + $0x18] sm:$0xff] %v760
        %s766 = sand.u32 %s75, 1
        %s767 = scalar_lea.sflag [#allocation4], %s766
        %s768 = sand.u32 %s75, 1
        %s769 = smul.addr %s768, 32
        %s770 = scalar_lea.vmem [#allocation7], %s769
        // Predicated region
        $region37: #{tpu_custom_call.1} parent=27 // pred_check
          %p771 = pneg %p85
        $region38: #{tpu_custom_call.1} parent=27 // pred_check_branch
          %773 = sbr.rel (%p771) target = $region40
        $region39: #{tpu_custom_call.1} parent=27 // pred_region
          %s774 = smul.u32 4, %s20
          %776 = vsyncadd %s767, 0
          %s777 = smul.addr %s774, 8
          %s778 = scalar_lea.hbm %s2, %s777
          %s780 = sshll.u32 %s770, 4
          %s781 = int_to_ptr.vmem [resolvable:$true] %s780
          %s782 = sshll.u32 %s778, 4
          %s783 = int_to_ptr.hbm [resolvable:$true] %s782
          %785 = dma.vmem_to_hbm [thread:$0]  %s781, 512, %s783, %s767
        $region40: #{tpu_custom_call.1} parent=27 // pred_fallthru
          _
      $region28: #{tpu_custom_call.1} parent=5 // pred_fallthru
        _
      %p786 = scmp.le.s32.totalorder 2, %s15
      // Predicated region
      $region41: #{tpu_custom_call.1} parent=5 // pred_check
        %p787 = pneg %p786
      $region42: #{tpu_custom_call.1} parent=5 // pred_check_branch
        %789 = sbr.rel (%p787) target = $region44
      $region43: #{tpu_custom_call.1} parent=5 // pred_region
        %s790 = ssub.s32 %s15, 2
        // Predicated region
        $region45: #{tpu_custom_call.1} parent=43 // pred_check
          %p791 = pneg %p91
        $region46: #{tpu_custom_call.1} parent=43 // pred_check_branch
          %793 = sbr.rel (%p791) target = $region48
        $region47: #{tpu_custom_call.1} parent=43 // pred_region
          %s794 = sand.u32 %s76, 1
          %s795 = scalar_lea.sflag [#allocation4], %s794
          %s796 = sand.u32 %s76, 1
          %s797 = smul.addr %s796, 32
          %s798 = scalar_lea.vmem [#allocation7], %s797
          %800 = dma.done %s795, 512
        $region48: #{tpu_custom_call.1} parent=43 // pred_fallthru
          _
      $region44: #{tpu_custom_call.1} parent=5 // pred_fallthru
        _
    $region6: #{tpu_custom_call.1} parent=1 // loop_footer
      %s19 = sadd.s32 1, %s15
    $region7: #{tpu_custom_call.1} parent=1 // loop_footer_branch
      %14 = sbr.rel target = $region3
    $region8: #{tpu_custom_call.1} parent=1 // loop_exit
      _
    %801 = vsyncpa [#allocation3], 1
    %s802 = scalar_lea.sflag [#allocation3], 1
    %803 = vsyncpa %s802, 1
    %804 = vsyncpa [#allocation6], 1
    %s805 = scalar_lea.sflag [#allocation6], 1
    %806 = vsyncpa %s805, 1
    %807 = vsyncpa [#allocation4], 1
    %s808 = scalar_lea.sflag [#allocation4], 1
    %809 = vsyncpa %s808, 1

</llo_original>
